<compile_context>
chip_gen: v5e
topology: v5e:2x2
jax: 0.10.0
libtpu: 0.0.40
codegen_flags: <defaults>
</compile_context>

<pallas_src>
import functools

import jax
import jax.numpy as jnp
from jax.experimental import pallas as pl
from jax.experimental.pallas import tpu as pltpu

LANE = 128


def _round_up(x, m):
    return (x + m - 1) // m * m


def _cdiv(a, b):
    return (a + b - 1) // b


# --------------------------------------------------------------------------- #
# Kernel
# --------------------------------------------------------------------------- #
def mapwrite_kernel(x_ref, w1_ref, b1_ref, wf_ref, bf_ref, out_ref, h_acc,
                    *, out_ch, matmul_dtype):
    k = pl.program_id(1)

    @pl.when(k == 0)
    def _():
        h_acc[...] = jnp.zeros_like(h_acc)

    # fc1 partial product for this K slice; accumulate in f32.
    # Cast to the MXU operand dtype *inside* the kernel -> no extra HBM pass.
    x = x_ref[...].astype(matmul_dtype)                       # (TB, TK)
    h_acc[...] += jnp.dot(x, w1_ref[...],
                          preferred_element_type=jnp.float32)  # (TB, 64) f32

    @pl.when(k == pl.num_programs(1) - 1)
    def _():
        h = h_acc[...] + b1_ref[...]
        h = jnp.where(h >= 0, h, 0.2 * h)                     # leaky_relu(0.2)

        # Fused fc2|fcp: one full 128-lane MXU pass on the padded weight.
        z = jnp.dot(h.astype(matmul_dtype), wf_ref[...],
                    preferred_element_type=jnp.float32) + bf_ref[...]

        # Per-column activation: [0, out_ch) -> leaky_relu, rest -> sigmoid.
        # (Padding columns evaluate sigmoid and are sliced off in the wrapper.)
        col = jax.lax.broadcasted_iota(jnp.int32, z.shape, 1)
        leaky = jnp.where(z >= 0, z, 0.2 * z)
        sig = jax.nn.sigmoid(z)
        out_ref[...] = jnp.where(col < out_ch, leaky, sig).astype(out_ref.dtype)


# --------------------------------------------------------------------------- #
# One-time parameter preparation (hoisted out of the per-call path)
# --------------------------------------------------------------------------- #
def prepare_params(params, *, matmul_dtype=jnp.float32):
    """Fuse fc2|fcp into one zero-padded 128-lane weight and cast MXU weight
    operands once. Biases stay f32 (activation math is always f32)."""
    w1, b1, w2, b2, wp, bp = params
    d_in, hidden = w1.shape
    out_ch = w2.shape[1]
    aa = wp.shape[1]
    n_fused = out_ch + aa
    n_pad = _round_up(max(n_fused, LANE), LANE)

    wf = (jnp.zeros((hidden, n_pad), jnp.float32)
          .at[:, :out_ch].set(w2)
          .at[:, out_ch:n_fused].set(wp))
    bf = (jnp.zeros((1, n_pad), jnp.float32)
          .at[:, :out_ch].set(b2)
          .at[:, out_ch:n_fused].set(bp))

    return dict(
        w1=jnp.asarray(w1, matmul_dtype),
        b1=jnp.asarray(b1, jnp.float32),
        wf=wf.astype(matmul_dtype),
        bf=bf,
        d_in=d_in, hidden=hidden, out_ch=out_ch, aa=aa, n_pad=n_pad,
        matmul_dtype=matmul_dtype,
    )


# --------------------------------------------------------------------------- #
# Tiling heuristics
# --------------------------------------------------------------------------- #
def _choose_tiles(B, D, hidden, n_pad, x_dtype, out_dtype, *,
                  target_tile_bytes=2 << 20, max_tk=2048):
    # K tile: full D when small; otherwise the largest lane-aligned divisor of D
    # (exact divisor so ragged-K garbage can never pollute the accumulation).
    if D <= max_tk:
        tk = D
    else:
        tk = D
        for cand in range(max_tk - (max_tk % LANE), LANE - 1, -LANE):
            if D % cand == 0:
                tk = cand
                break
    nk = D // tk

    x_bytes = jnp.dtype(x_dtype).itemsize
    out_bytes = jnp.dtype(out_dtype).itemsize
    per_row = x_bytes * tk + out_bytes * n_pad + 4 * hidden   # x + out + h_acc
    tb = max(8, (target_tile_bytes // per_row) // 8 * 8)
    tb = min(tb, _round_up(B, 8))
    if B > 8:
        # Keep >= 2 batch grid steps so both v7x TensorCores get work.
        tb = min(tb, _round_up(_cdiv(B, 2), 8))
    return tb, tk, nk


# --------------------------------------------------------------------------- #
# Forward
# --------------------------------------------------------------------------- #
def map_write_forward(x_nchw, prepared, *, out_dtype=jnp.float32,
                      target_tile_bytes=2 << 20):
    """x_nchw: (B, C, A, A). Returns (w, p) matching the PyTorch module."""
    B = x_nchw.shape[0]
    x_flat = x_nchw.reshape(B, -1)          # metadata-only reshape, no HBM pass
    D = x_flat.shape[1]
    assert D == prepared["d_in"], "input feature size mismatch"

    hidden = prepared["hidden"]
    out_ch = prepared["out_ch"]
    aa = prepared["aa"]
    n_pad = prepared["n_pad"]
    matmul_dtype = prepared["matmul_dtype"]

    tb, tk, nk = _choose_tiles(B, D, hidden, n_pad, x_flat.dtype, out_dtype,
                               target_tile_bytes=target_tile_bytes)
    grid = (_cdiv(B, tb), nk)

    # VMEM budget for this tiling (double-buffered streams + weights + f32
    # accumulator), 1.5x headroom, capped well under v7x's 64 MiB physical.
    x_bytes = jnp.dtype(x_flat.dtype).itemsize
    w_bytes = jnp.dtype(matmul_dtype).itemsize
    out_bytes = jnp.dtype(out_dtype).itemsize
    vmem_bytes = (2 * tb * tk * x_bytes
                  + 2 * tb * n_pad * out_bytes
                  + 2 * tk * hidden * w_bytes
                  + 2 * hidden * n_pad * w_bytes
                  + 2 * (hidden + n_pad) * 4
                  + tb * hidden * 4)
    vmem_limit = int(min(48 << 20, max(32 << 20, int(1.5 * vmem_bytes) + (2 << 20))))

    kernel = functools.partial(mapwrite_kernel, out_ch=out_ch,
                               matmul_dtype=matmul_dtype)

    out = pl.pallas_call(
        kernel,
        out_shape=jax.ShapeDtypeStruct((B, n_pad), out_dtype),
        grid_spec=pltpu.PrefetchScalarGridSpec(
            num_scalar_prefetch=0,
            grid=grid,
            in_specs=[
                pl.BlockSpec((tb, tk), lambda i, k: (i, k)),        # x (streamed)
                pl.BlockSpec((tk, hidden), lambda i, k: (k, 0)),    # w1 K-slice
                pl.BlockSpec((1, hidden), lambda i, k: (0, 0)),     # b1 (resident)
                pl.BlockSpec((hidden, n_pad), lambda i, k: (0, 0)),  # fused w2|wp
                pl.BlockSpec((1, n_pad), lambda i, k: (0, 0)),       # fused b2|bp
            ],
            out_specs=pl.BlockSpec((tb, n_pad), lambda i, k: (i, 0)),
            scratch_shapes=[pltpu.VMEM((tb, hidden), jnp.float32)],  # h accumulator
        ),
        compiler_params=pltpu.CompilerParams(
            dimension_semantics=("parallel", "arbitrary"),
            vmem_limit_bytes=vmem_limit),
    )(x_flat, prepared["w1"], prepared["b1"], prepared["wf"], prepared["bf"])

    w_out = out[:, :out_ch]
    p_out = out[:, out_ch:out_ch + aa]
    return w_out, p_out


# --------------------------------------------------------------------------- #
# Synthetic params + pure-JAX reference
# --------------------------------------------------------------------------- #
def init_params(key, attn_size, in_channels, out_channels):
    """Deterministic synthetic init (uniform, PyTorch Linear-like scale).
    Weights stored transposed: (in_features, out_features). Biases (1, N)."""
    d_in = attn_size * attn_size * in_channels
    hidden = 64
    aa = attn_size * attn_size
    keys = jax.random.split(key, 6)

    def lin(kw, kb, fan_in, fan_out):
        bound = 1.0 / jnp.sqrt(fan_in)
        w = jax.random.uniform(kw, (fan_in, fan_out), jnp.float32, -bound, bound)
        b = jax.random.uniform(kb, (1, fan_out), jnp.float32, -bound, bound)
        return w, b

    w1, b1 = lin(keys[0], keys[1], d_in, hidden)
    w2, b2 = lin(keys[2], keys[3], hidden, out_channels)
    wp, bp = lin(keys[4], keys[5], hidden, aa)
    return (w1, b1, w2, b2, wp, bp)


def map_write_reference(x_nchw, params):
    w1, b1, w2, b2, wp, bp = params
    x = x_nchw.reshape(x_nchw.shape[0], -1)
    h = x @ w1 + b1
    h = jnp.where(h >= 0, h, 0.2 * h)
    w = h @ w2 + b2
    w = jnp.where(w >= 0, w, 0.2 * w)
    p = jax.nn.sigmoid(h @ wp + bp)
    return w, p


# TODO(synk): MapWrite.print_info (constructor-time parameter-count logging) is
# host-side only and intentionally not part of the kernel.

if __name__ == "__main__":
    attn_size = 4
    in_channels = 4
    out_channels = 8

    key = jax.random.PRNGKey(0)
    k_x1, k_x2, k_p = jax.random.split(key, 3)
    params = init_params(k_p, attn_size, in_channels, out_channels)

    # --- f32 path, tiny batch (single grid step) ------------------------------
    prep_f32 = prepare_params(params)                     # hoisted, built once
    x_small = jax.random.normal(k_x1, (2, in_channels, attn_size, attn_size),
                                dtype=jnp.float32)
    w_out, p_out = map_write_forward(x_small, prep_f32)
    jax.block_until_ready((w_out, p_out))
    w_ref, p_ref = map_write_reference(x_small, params)
    assert w_out.shape == (2, out_channels)
    assert p_out.shape == (2, attn_size * attn_size)
    assert jnp.allclose(w_out, w_ref, atol=1e-5, rtol=1e-5)
    assert jnp.allclose(p_out, p_ref, atol=1e-5, rtol=1e-5)

    # --- f32 path, ragged multi-tile batch (no-pad cdiv grid, 2 batch steps) ---
    x_big = jax.random.normal(k_x2, (20, in_channels, attn_size, attn_size),
                              dtype=jnp.float32)
    w_out, p_out = map_write_forward(x_big, prep_f32)
    jax.block_until_ready((w_out, p_out))
    w_ref, p_ref = map_write_reference(x_big, params)
    assert w_out.shape == (20, out_channels)
    assert p_out.shape == (20, attn_size * attn_size)
    assert jnp.allclose(w_out, w_ref, atol=1e-5, rtol=1e-5)
    assert jnp.allclose(p_out, p_ref, atol=1e-5, rtol=1e-5)

    # --- bandwidth mode: bf16 MXU operands + bf16 padded output ---------------
    prep_bf16 = prepare_params(params, matmul_dtype=jnp.bfloat16)
    w_bf, p_bf = map_write_forward(x_big, prep_bf16, out_dtype=jnp.bfloat16)
    jax.block_until_ready((w_bf, p_bf))
    assert jnp.allclose(w_bf.astype(jnp.float32), w_ref, atol=2e-2, rtol=2e-2)
    assert jnp.allclose(p_bf.astype(jnp.float32), p_ref, atol=2e-2, rtol=2e-2)

    print("KERNEL_OK")
</pallas_src>

<mosaic_0001>
module attributes {stable_mosaic.version = 11 : i64} {
  func.func @mapwrite_kernel(%arg0: i32, %arg1: i32, %arg2: memref<8x64xf32, #tpu.memory_space<vmem>>, %arg3: memref<64x64xf32, #tpu.memory_space<vmem>>, %arg4: memref<1x64xf32, #tpu.memory_space<vmem>>, %arg5: memref<64x128xf32, #tpu.memory_space<vmem>>, %arg6: memref<1x128xf32, #tpu.memory_space<vmem>>, %arg7: memref<8x128xf32, #tpu.memory_space<vmem>>, %arg8: memref<8x64xf32, #tpu.memory_space<vmem>>) attributes {dimension_semantics = [#tpu.dimension_semantics<parallel>, #tpu.dimension_semantics<arbitrary>], iteration_bounds = array<i64: 1, 1>, scalar_prefetch = 0 : i64, scratch_operands = 1 : i64, tpu.core_type = #tpu.core_type<tc>, window_params = [{transform_indices = @transform_0, window_bounds = array<i64: 8, 64>}, {transform_indices = @transform_1, window_bounds = array<i64: 64, 64>}, {pipeline_mode = #tpu.pipeline_mode<synchronous>, transform_indices = @transform_2, window_bounds = array<i64: 1, 64>}, {pipeline_mode = #tpu.pipeline_mode<synchronous>, transform_indices = @transform_3, window_bounds = array<i64: 64, 128>}, {pipeline_mode = #tpu.pipeline_mode<synchronous>, transform_indices = @transform_4, window_bounds = array<i64: 1, 128>}, {transform_indices = @transform_5, window_bounds = array<i64: 8, 128>}]} {
    %c0_i32 = arith.constant 0 : i32
    %0 = arith.cmpi eq, %arg1, %c0_i32 : i32
    %1 = arith.extui %0 : i1 to i32
    %c0_i32_0 = arith.constant 0 : i32
    %2 = arith.cmpi ne, %1, %c0_i32_0 : i32
    scf.if %2 {
      %cst_10 = arith.constant 0.000000e+00 : f32
      %12 = vector.broadcast %cst_10 : f32 to vector<8x64xf32>
      %c0_11 = arith.constant 0 : index
      %c0_12 = arith.constant 0 : index
      %13 = vector.load %arg8[%c0_11, %c0_12] : memref<8x64xf32, #tpu.memory_space<vmem>>, vector<8x64xf32>
      tpu.vector_store %arg8[%c0_11, %c0_12], %12 {strides = array<i32>} : memref<8x64xf32, #tpu.memory_space<vmem>>, vector<8x64xf32>,
    } else {
    }
    %c0 = arith.constant 0 : index
    %c0_1 = arith.constant 0 : index
    %3 = vector.load %arg2[%c0, %c0_1] : memref<8x64xf32, #tpu.memory_space<vmem>>, vector<8x64xf32>
    %c0_2 = arith.constant 0 : index
    %c0_3 = arith.constant 0 : index
    %4 = vector.load %arg8[%c0_2, %c0_3] : memref<8x64xf32, #tpu.memory_space<vmem>>, vector<8x64xf32>
    %c0_4 = arith.constant 0 : index
    %c0_5 = arith.constant 0 : index
    %5 = vector.load %arg3[%c0_4, %c0_5] : memref<64x64xf32, #tpu.memory_space<vmem>>, vector<64x64xf32>
    %cst = arith.constant dense<0.000000e+00> : vector<8x64xf32>
    %6 = tpu.matmul %3, %5, %cst {dimension_numbers = #tpu.dot_dimension_numbers<[1], [0], [0], [1], [0, 0, 1, 1], [], []>} : vector<8x64xf32>, vector<64x64xf32>, vector<8x64xf32> -> vector<8x64xf32>
    %7 = arith.addf %4, %6 : vector<8x64xf32>
    %c0_6 = arith.constant 0 : index
    %c0_7 = arith.constant 0 : index
    %8 = vector.load %arg8[%c0_6, %c0_7] : memref<8x64xf32, #tpu.memory_space<vmem>>, vector<8x64xf32>
    tpu.vector_store %arg8[%c0_6, %c0_7], %7 {strides = array<i32>} : memref<8x64xf32, #tpu.memory_space<vmem>>, vector<8x64xf32>,
    %c0_i32_8 = arith.constant 0 : i32
    %9 = arith.cmpi eq, %arg1, %c0_i32_8 : i32
    %10 = arith.extui %9 : i1 to i32
    %c0_i32_9 = arith.constant 0 : i32
    %11 = arith.cmpi ne, %10, %c0_i32_9 : i32
    scf.if %11 {
      %c0_10 = arith.constant 0 : index
      %c0_11 = arith.constant 0 : index
      %12 = vector.load %arg8[%c0_10, %c0_11] : memref<8x64xf32, #tpu.memory_space<vmem>>, vector<8x64xf32>
      %c0_12 = arith.constant 0 : index
      %c0_13 = arith.constant 0 : index
      %13 = vector.load %arg4[%c0_12, %c0_13] : memref<1x64xf32, #tpu.memory_space<vmem>>, vector<1x64xf32>
      %14 = vector.broadcast %13 : vector<1x64xf32> to vector<8x64xf32>
      %15 = arith.addf %12, %14 : vector<8x64xf32>
      %cst_14 = arith.constant 0.000000e+00 : f32
      %16 = vector.broadcast %cst_14 : f32 to vector<8x64xf32>
      %17 = arith.cmpf oge, %15, %16 : vector<8x64xf32>
      %cst_15 = arith.constant 2.000000e-01 : f32
      %18 = vector.broadcast %cst_15 : f32 to vector<8x64xf32>
      %19 = arith.mulf %18, %15 : vector<8x64xf32>
      %20 = arith.select %17, %15, %19 : vector<8x64xi1>, vector<8x64xf32>
      %c0_16 = arith.constant 0 : index
      %c0_17 = arith.constant 0 : index
      %21 = vector.load %arg5[%c0_16, %c0_17] : memref<64x128xf32, #tpu.memory_space<vmem>>, vector<64x128xf32>
      %cst_18 = arith.constant dense<0.000000e+00> : vector<8x128xf32>
      %22 = tpu.matmul %20, %21, %cst_18 {dimension_numbers = #tpu.dot_dimension_numbers<[1], [0], [0], [1], [0, 0, 1, 1], [], []>} : vector<8x64xf32>, vector<64x128xf32>, vector<8x128xf32> -> vector<8x128xf32>
      %c0_19 = arith.constant 0 : index
      %c0_20 = arith.constant 0 : index
      %23 = vector.load %arg6[%c0_19, %c0_20] : memref<1x128xf32, #tpu.memory_space<vmem>>, vector<1x128xf32>
      %24 = vector.broadcast %23 : vector<1x128xf32> to vector<8x128xf32>
      %25 = arith.addf %22, %24 : vector<8x128xf32>
      %26 = tpu.iota {dimensions = array<i32: 1>} : vector<8x128xi32>
      %cst_21 = arith.constant 0.000000e+00 : f32
      %27 = vector.broadcast %cst_21 : f32 to vector<8x128xf32>
      %28 = arith.cmpf oge, %25, %27 : vector<8x128xf32>
      %cst_22 = arith.constant 2.000000e-01 : f32
      %29 = vector.broadcast %cst_22 : f32 to vector<8x128xf32>
      %30 = arith.mulf %29, %25 : vector<8x128xf32>
      %31 = arith.select %28, %25, %30 : vector<8x128xi1>, vector<8x128xf32>
      %32 = arith.negf %25 : vector<8x128xf32>
      %33 = math.exp %32 : vector<8x128xf32>
      %cst_23 = arith.constant 1.000000e+00 : f32
      %34 = vector.broadcast %cst_23 : f32 to vector<8x128xf32>
      %35 = arith.addf %34, %33 : vector<8x128xf32>
      %36 = arith.divf %34, %35 : vector<8x128xf32>
      %c8_i32 = arith.constant 8 : i32
      %37 = vector.broadcast %c8_i32 : i32 to vector<8x128xi32>
      %38 = arith.cmpi slt, %26, %37 : vector<8x128xi32>
      %39 = arith.select %38, %31, %36 : vector<8x128xi1>, vector<8x128xf32>
      %c0_24 = arith.constant 0 : index
      %c0_25 = arith.constant 0 : index
      %40 = vector.load %arg7[%c0_24, %c0_25] : memref<8x128xf32, #tpu.memory_space<vmem>>, vector<8x128xf32>
      tpu.vector_store %arg7[%c0_24, %c0_25], %39 {strides = array<i32>} : memref<8x128xf32, #tpu.memory_space<vmem>>, vector<8x128xf32>,
    } else {
    }
    return
  }
  func.func @transform_0(%arg0: i32, %arg1: i32) -> (i32, i32) {
    %c0_i32 = arith.constant 0 : i32
    return %arg0, %arg1 : i32, i32
  }
  func.func @transform_1(%arg0: i32, %arg1: i32) -> (i32, i32) {
    %c0_i32 = arith.constant 0 : i32
    %c0_i32_0 = arith.constant 0 : i32
    return %arg1, %c0_i32 : i32, i32
  }
  func.func @transform_2(%arg0: i32, %arg1: i32) -> (i32, i32) {
    %c0_i32 = arith.constant 0 : i32
    %c0_i32_0 = arith.constant 0 : i32
    %c0_i32_1 = arith.constant 0 : i32
    return %c0_i32, %c0_i32_0 : i32, i32
  }
  func.func @transform_3(%arg0: i32, %arg1: i32) -> (i32, i32) {
    %c0_i32 = arith.constant 0 : i32
    %c0_i32_0 = arith.constant 0 : i32
    %c0_i32_1 = arith.constant 0 : i32
    return %c0_i32, %c0_i32_0 : i32, i32
  }
  func.func @transform_4(%arg0: i32, %arg1: i32) -> (i32, i32) {
    %c0_i32 = arith.constant 0 : i32
    %c0_i32_0 = arith.constant 0 : i32
    %c0_i32_1 = arith.constant 0 : i32
    return %c0_i32, %c0_i32_0 : i32, i32
  }
  func.func @transform_5(%arg0: i32, %arg1: i32) -> (i32, i32) {
    %c0_i32 = arith.constant 0 : i32
    %c0_i32_0 = arith.constant 0 : i32
    return %arg0, %c0_i32 : i32, i32
  }
}

</mosaic_0001>

<llo_original>
// kernel: tpu_custom_call.1
$region0: #{tpu_custom_call.1}
  #allocation0 [shape = 'u32[]', space=smem, size = 0x4, offset = 0x4, fixed_abs, tag = 'smem constant byte address 0x4 - core index']
  #allocation1 [shape = 'u32[72,128]{1,0:T(1,128)}', space=vmem, size = 0x9000, scoped, tag = 'internal scratch']
  #allocation2 [shape = 'f32[8,64]{1,0:T(8,128)}', space=vmem, size = 0x1000, scoped, tag = 'scratch operand']
  %s0 = inlined_call_operand.hbm [shape: f32[2,64], index: 0, kind: input, shape index: {}]
  %s1 = inlined_call_operand.hbm [shape: f32[64,64], index: 1, kind: input, shape index: {}]
  %s2 = inlined_call_operand.vmem [shape: f32[1,64], index: 2, kind: input, shape index: {}]
  %s3 = inlined_call_operand.hbm [shape: f32[64,128], index: 3, kind: input, shape index: {}]
  %s4 = inlined_call_operand.vmem [shape: f32[1,128], index: 4, kind: input, shape index: {}]
  %s5 = inlined_call_operand.hbm [shape: f32[2,128], index: 5, kind: output, shape index: {}]
  %s6 = sld [smem:[#allocation0]]
  $region50: #{tpu_custom_call.1} parent=0
    _
  %s8 = ssub.s32 1, %s6
  %s9 = scalar_select 0, %s8, %s6
  $region1: #{tpu_custom_call.1} parent=0
    #allocation3 [shape = 'u8[4096]{0}', space=vmem, size = 0x1000, scoped, tag = 'input window, operand 0, single buffered']
    #allocation4 [shape = 's32[1]{0}', space=sflag, size = 0x4, scoped, tag = 'scoped memory for tpu_custom_call.1']
    #allocation5 [shape = 's32[1]{0}', space=sflag, size = 0x4, scoped, tag = 'scoped memory for tpu_custom_call.1']
    #allocation6 [shape = 'u8[32768]{0}', space=vmem, size = 0x8000, scoped, tag = 'input window, operand 1, single buffered']
    #allocation7 [shape = 's32[1]{0}', space=sflag, size = 0x4, scoped, tag = 'scoped memory for tpu_custom_call.1']
    #allocation8 [shape = 'u8[32768]{0}', space=vmem, size = 0x8000, scoped, tag = 'input window, operand 3, single buffered']
    #allocation9 [shape = 'u8[4096]{0}', space=vmem, size = 0x1000, scoped, tag = 'output window, operand 0, single buffered']
    %10 = vsyncpa [#allocation4], 0
    %11 = vsyncpa [#allocation7], 0
    %12 = vsyncpa [#allocation5], 0
    // Predicated region
    $region2: #{tpu_custom_call.1} parent=1 // pred_check
      _
    $region3: #{tpu_custom_call.1} parent=1 // pred_check_branch
      %14 = sbr.rel (0) target = $region5
    $region4: #{tpu_custom_call.1} parent=1 // pred_region
      %16 = vsyncadd [#allocation4], 96
      %s17 = sshll.u32 %s0, 4
      %s18 = int_to_ptr.hbm [resolvable:$true] %s17
      %s19 = sshll.u32 [#allocation3], 4
      %s20 = int_to_ptr.vmem [resolvable:$true] %s19
      %25 = dma.hbm_to_vmem [thread:$0]  %s18, 32, %s20, [#allocation4], 32, 32, 2
    $region5: #{tpu_custom_call.1} parent=1 // pred_fallthru
      _
    // Predicated region
    $region6: #{tpu_custom_call.1} parent=1 // pred_check
      _
    $region7: #{tpu_custom_call.1} parent=1 // pred_check_branch
      %27 = sbr.rel (0) target = $region9
    $region8: #{tpu_custom_call.1} parent=1 // pred_region
      %29 = vsyncadd [#allocation7], 0
      %s30 = sshll.u32 %s1, 4
      %s31 = int_to_ptr.hbm [resolvable:$true] %s30
      %s32 = sshll.u32 [#allocation6], 4
      %s33 = int_to_ptr.vmem [resolvable:$true] %s32
      %38 = dma.hbm_to_vmem [thread:$0]  %s31, 1024, %s33, [#allocation7], 128, 128, 8
    $region9: #{tpu_custom_call.1} parent=1 // pred_fallthru
      _
    // Predicated region
    $region10: #{tpu_custom_call.1} parent=1 // pred_check
      _
    $region11: #{tpu_custom_call.1} parent=1 // pred_check_branch
      %40 = sbr.rel (0) target = $region13
    $region12: #{tpu_custom_call.1} parent=1 // pred_region
      _
    $region13: #{tpu_custom_call.1} parent=1 // pred_fallthru
      _
    // Predicated region
    $region14: #{tpu_custom_call.1} parent=1 // pred_check
      _
    $region15: #{tpu_custom_call.1} parent=1 // pred_check_branch
      %42 = sbr.rel (0) target = $region17
    $region16: #{tpu_custom_call.1} parent=1 // pred_region
      %44 = vsyncadd [#allocation7], 0
      %s45 = sshll.u32 %s3, 4
      %s46 = int_to_ptr.hbm [resolvable:$true] %s45
      %s47 = sshll.u32 [#allocation8], 4
      %s48 = int_to_ptr.vmem [resolvable:$true] %s47
      %53 = dma.hbm_to_vmem [thread:$0]  %s46, 1024, %s48, [#allocation7], 128, 128, 8
    $region17: #{tpu_custom_call.1} parent=1 // pred_fallthru
      _
    // Predicated region
    $region18: #{tpu_custom_call.1} parent=1 // pred_check
      _
    $region19: #{tpu_custom_call.1} parent=1 // pred_check_branch
      %55 = sbr.rel (0) target = $region21
    $region20: #{tpu_custom_call.1} parent=1 // pred_region
      _
    $region21: #{tpu_custom_call.1} parent=1 // pred_fallthru
      _
    // Predicated region
    $region22: #{tpu_custom_call.1} parent=1 // pred_check
      _
    $region23: #{tpu_custom_call.1} parent=1 // pred_check_branch
      %57 = sbr.rel (0) target = $region25
    $region24: #{tpu_custom_call.1} parent=1 // pred_region
      %59 = dma.done [#allocation4], 128
    $region25: #{tpu_custom_call.1} parent=1 // pred_fallthru
      _
    // Predicated region
    $region26: #{tpu_custom_call.1} parent=1 // pred_check
      _
    $region27: #{tpu_custom_call.1} parent=1 // pred_check_branch
      %61 = sbr.rel (0) target = $region29
    $region28: #{tpu_custom_call.1} parent=1 // pred_region
      %63 = dma.done [#allocation7], 1024
    $region29: #{tpu_custom_call.1} parent=1 // pred_fallthru
      _
    // Predicated region
    $region30: #{tpu_custom_call.1} parent=1 // pred_check
      _
    $region31: #{tpu_custom_call.1} parent=1 // pred_check_branch
      %65 = sbr.rel (0) target = $region33
    $region32: #{tpu_custom_call.1} parent=1 // pred_region
      %67 = dma.done [#allocation7], 1024
    $region33: #{tpu_custom_call.1} parent=1 // pred_fallthru
      _
    %p68 = scmp.eq.s32.totalorder 0, 0
    // Predicated region
    $region34: #{tpu_custom_call.1} parent=1 // pred_check
      %p69 = pneg %p68
    $region35: #{tpu_custom_call.1} parent=1 // pred_check_branch
      %71 = sbr.rel (%p69) target = $region37
    $region36: #{tpu_custom_call.1} parent=1 // pred_region
      %vm72 = vcmask 523264
      %73 = vst.msk [vmem:[#allocation2] sm:$0xff] %vm72, 0.0
    $region37: #{tpu_custom_call.1} parent=1 // pred_fallthru
      _
    %v74 = vld [vmem:[#allocation3] sm:$0xff]
    %v75 = vld [vmem:[#allocation2] sm:$0xff]
    %v76 = vld [vmem:[#allocation6] sm:$0xff]
    %v77 = vld [vmem:[#allocation6 + $0x8] sm:$0xff]
    %v78 = vld [vmem:[#allocation6 + $0x10] sm:$0xff]
    %v79 = vld [vmem:[#allocation6 + $0x18] sm:$0xff]
    %v80 = vld [vmem:[#allocation6 + $0x20] sm:$0xff]
    %v81 = vld [vmem:[#allocation6 + $0x28] sm:$0xff]
    %v82 = vld [vmem:[#allocation6 + $0x30] sm:$0xff]
    %v83 = vld [vmem:[#allocation6 + $0x38] sm:$0xff]
    %vm84 = vcmask 523264
    %v86 = vsel %vm84, %v74, 0
    %88 = vmatpush.msra.mxu0 0.0
    %89 = vmatpush.msra.mxu0 0.0
    %90 = vmatpush.msra.mxu0 0.0
    %91 = vmatpush.msra.mxu0 0.0
    %92 = vmatpush.msra.mxu0 0.0
    %93 = vmatpush.msra.mxu0 0.0
    %94 = vmatpush.msra.mxu0 0.0
    %95 = vmatpush.msra.mxu0 0.0
    %96 = vmatpush.msra.mxu0 %v83
    %97 = vmatpush.msra.mxu0 %v82
    %98 = vmatpush.msra.mxu0 %v81
    %99 = vmatpush.msra.mxu0 %v80
    %100 = vmatpush.msra.mxu0 %v79
    %101 = vmatpush.msra.mxu0 %v78
    %102 = vmatpush.msra.mxu0 %v77
    %103 = vmatpush.msra.mxu0 %v76
    %104 = vmatmul.f32.gmra.mxu0 %v86
    %v105 = vpop.f32.mrf.mxu0
    %v106 = vadd.f32 0.0, %v105
    %107 = vdwg.mxu0
    %v108 = vadd.f32 %v75, %v106
    %109 = vst.msk [vmem:[#allocation2] sm:$0xff] %vm84, %v108
    // Predicated region
    $region38: #{tpu_custom_call.1} parent=1 // pred_check
      %p110 = pneg %p68
    $region39: #{tpu_custom_call.1} parent=1 // pred_check_branch
      %112 = sbr.rel (%p110) target = $region41
    $region40: #{tpu_custom_call.1} parent=1 // pred_region
      %v113 = vld [vmem:[#allocation2] sm:$0xff]
      %v114 = vld [vmem:[%s2] sm:$0x1]
      %v116 = vperm.slane %v114, 0
      %v118 = vadd.f32 %v113, %v116
      %vm119 = vcmp.ge.f32.partialorder %v118, 0.0
      %v120 = vmul.f32 %v118, 0.2
      %v121 = vsel %vm119, %v118, %v120
      %v122 = vld [vmem:[#allocation8] sm:$0xff]
      %v123 = vld [vmem:[#allocation8 + $0x8] sm:$0xff]
      %v124 = vld [vmem:[#allocation8 + $0x10] sm:$0xff]
      %v125 = vld [vmem:[#allocation8 + $0x18] sm:$0xff]
      %v126 = vld [vmem:[#allocation8 + $0x20] sm:$0xff]
      %v127 = vld [vmem:[#allocation8 + $0x28] sm:$0xff]
      %v128 = vld [vmem:[#allocation8 + $0x30] sm:$0xff]
      %v129 = vld [vmem:[#allocation8 + $0x38] sm:$0xff]
      %v130 = vld [vmem:[%s4] sm:$0x1]
      %v132 = vperm.slane %v130, 0
      %v135 = vsel %vm84, %v121, 0
      %137 = vmatpush.msra.mxu0 0.0
      %138 = vmatpush.msra.mxu0 0.0
      %139 = vmatpush.msra.mxu0 0.0
      %140 = vmatpush.msra.mxu0 0.0
      %141 = vmatpush.msra.mxu0 0.0
      %142 = vmatpush.msra.mxu0 0.0
      %143 = vmatpush.msra.mxu0 0.0
      %144 = vmatpush.msra.mxu0 0.0
      %145 = vmatpush.msra.mxu0 %v129
      %146 = vmatpush.msra.mxu0 %v128
      %147 = vmatpush.msra.mxu0 %v127
      %148 = vmatpush.msra.mxu0 %v126
      %149 = vmatpush.msra.mxu0 %v125
      %150 = vmatpush.msra.mxu0 %v124
      %151 = vmatpush.msra.mxu0 %v123
      %152 = vmatpush.msra.mxu0 %v122
      %153 = vmatmul.f32.gmra.mxu0 %v135
      %v154 = vpop.f32.mrf.mxu0
      %v155 = vadd.f32 %v132, %v154
      %156 = vdwg.mxu0
      %v157 = vlaneseq
      %v158 = vand.u32 %v157, 127
      %vm159 = vcmp.ge.f32.partialorder %v155, 0.0
      %v160 = vmul.f32 %v155, 0.2
      %v161 = vsel %vm159, %v155, %v160
      %v162 = vxor.u32 %v155, 2147483648
      %v163 = vmul.f32 %v162, 1.442695
      %v164 = vpow.pop %v163
      %v165 = vadd.f32 %v164, 1.0
      %v166 = vrcp.pop %v165
      %v167 = vmul.f32 %v165, %v166
      %v168 = vsub.f32 1.0, %v167
      %v169 = vmul.f32 %v166, %v168
      %v170 = vadd.f32 %v166, %v169
      %vm171 = vweird.f32 %v165
      %vm172 = vweird.f32 %v166
      %vm173 = vmor %vm171, %vm172
      %v174 = vsel %vm173, %v166, %v170
      %v175 = vand.u32 2147483647, %v165
      %vm176 = vcmp.eq.f32.partialorder %v175, 8.507059e+37
      %v177 = vand.u32 %v165, 2147483648
      %v178 = vor.u32 1.1754944e-38, %v177
      %v179 = vsel %vm176, %v178, %v174
      %v180 = vmul.f32 1.0, %v179
      %vm181 = vcmp.lt.s32.totalorder %v158, 8
      %v182 = vsel %vm181, %v161, %v180
      %183 = vst [vmem:[#allocation9] sm:$0xff] %v182
    $region41: #{tpu_custom_call.1} parent=1 // pred_fallthru
      _
    // Predicated region
    $region42: #{tpu_custom_call.1} parent=1 // pred_check
      _
    $region43: #{tpu_custom_call.1} parent=1 // pred_check_branch
      %185 = sbr.rel (0) target = $region45
    $region44: #{tpu_custom_call.1} parent=1 // pred_region
      %187 = vsyncadd [#allocation5], 96
      %s188 = sshll.u32 [#allocation9], 4
      %s189 = int_to_ptr.vmem [resolvable:$true] %s188
      %s190 = sshll.u32 %s5, 4
      %s191 = int_to_ptr.hbm [resolvable:$true] %s190
      %196 = dma.vmem_to_hbm [thread:$0]  %s189, 32, %s191, [#allocation5], 32, 32, 2
    $region45: #{tpu_custom_call.1} parent=1 // pred_fallthru
      _
    // Predicated region
    $region46: #{tpu_custom_call.1} parent=1 // pred_check
      _
    $region47: #{tpu_custom_call.1} parent=1 // pred_check_branch
      %198 = sbr.rel (0) target = $region49
    $region48: #{tpu_custom_call.1} parent=1 // pred_region
      %200 = dma.done [#allocation5], 128
    $region49: #{tpu_custom_call.1} parent=1 // pred_fallthru
      _
    %201 = vsyncpa [#allocation4], 1
    %202 = vsyncpa [#allocation7], 1
    %203 = vsyncpa [#allocation5], 1

</llo_original>
